<compile_context>
chip_gen: v7x
topology: tpu7x:2x2x1
jax: 0.10.0
libtpu: 0.0.40
codegen_flags: <defaults>
</compile_context>

<pallas_src>
import jax
import jax.numpy as jnp
from jax.experimental import pallas as pl
from jax.experimental.pallas import tpu as pltpu


def _fused_kernel(z_ref, x_ref, wa_ref, wb_ref, b_ref, o_ref):
    # z_ref : [n_states,   TB]   feature-major activation tile (batch on lanes)
    # x_ref : [input_size, TB]   feature-major activation tile
    # wa_ref: [n_states, n_states]   A.weight, PyTorch [out, in] layout (resident)
    # wb_ref: [n_states, input_size] B.weight (resident)
    # b_ref : [n_states, 1]          fused bias A_b + B_b (resident)
    # o_ref : [n_states, TB]         lane-dense output tile
    y = jnp.dot(wa_ref[...], z_ref[...], preferred_element_type=jnp.float32)
    y = y + jnp.dot(wb_ref[...], x_ref[...], preferred_element_type=jnp.float32)
    y = y + b_ref[...]
    o_ref[...] = jnp.maximum(y, 0.0).astype(o_ref.dtype)


def prepare_params(a_weight, a_bias, b_weight, b_bias):
    """One-time parameter prep (at init, NOT per forward call).

    Weights are kept in PyTorch [out, in] layout (exactly what the
    feature-major kernel consumes); only the biases are fused.
    Returns (a_weight, b_weight, bias[N, 1]).
    """
    n_states = a_weight.shape[0]
    bias = (a_bias + b_bias).reshape(n_states, 1)
    return a_weight, b_weight, bias


def _pick_block_b(B, *, max_block_b=8192, min_grid=4):
    """Batch (lane) tile: single full block for small B (launch-bound regime),
    otherwise a 128-multiple sized so there are >= min_grid steps (DMA/compute
    overlap per core + batch sharding across v7x's two TensorCores)."""
    if B <= 2048:
        return B
    tb = pl.cdiv(B, min_grid)
    tb = ((tb + 127) // 128) * 128
    return min(tb, max_block_b)


def _build_call(n_states, input_size, B, tb, out_dtype, *, fuse_inputs=False):
    # Lane-dense-store invariant: tile is a 128-multiple or the full batch.
    assert tb == B or tb % 128 == 0, "batch tile must be a multiple of 128 (or the full batch)"
    grid = (pl.cdiv(B, tb),)   # partial last block handled by Pallas masking (no jnp.pad)
    allow_fusion = [True, True, False, False, False] if fuse_inputs else None
    return pl.pallas_call(
        _fused_kernel,
        out_shape=jax.ShapeDtypeStruct((n_states, B), out_dtype),
        grid=grid,
        in_specs=[
            pl.BlockSpec((n_states, tb), lambda i: (0, i)),        # z^T tile (streamed)
            pl.BlockSpec((input_size, tb), lambda i: (0, i)),      # x^T tile (streamed)
            pl.BlockSpec((n_states, n_states), lambda i: (0, 0)),  # A weight (resident)
            pl.BlockSpec((n_states, input_size), lambda i: (0, 0)),# B weight (resident)
            pl.BlockSpec((n_states, 1), lambda i: (0, 0)),         # fused bias (resident)
        ],
        out_specs=pl.BlockSpec((n_states, tb), lambda i: (0, i)),
        compiler_params=pltpu.CompilerParams(
            dimension_semantics=("parallel",),      # batch loop shardable over TCs (v7x)
            vmem_limit_bytes=32 * 1024 * 1024,      # tiny footprint; safe on all gens
            allow_input_fusion=allow_fusion,        # let XLA fuse z.T/x.T producers in
        ),
    )


def shallow_fcn_fwd_fm(z_t, x_t, a_weight, b_weight, bias, *, max_block_b=8192):
    """Feature-major fast path (preferred): z_t [n_states, B], x_t [input_size, B]
    -> [n_states, B].  No layout ops anywhere on the hot path."""
    n_states, B = z_t.shape
    input_size = x_t.shape[0]
    tb = _pick_block_b(B, max_block_b=max_block_b)
    call = _build_call(n_states, input_size, B, tb, z_t.dtype)
    return call(z_t, x_t, a_weight, b_weight, bias)


def shallow_fcn_fwd(z, x, a_weight, b_weight, bias, *, max_block_b=8192):
    """PyTorch-layout compat wrapper: z [B, n_states], x [B, input_size]
    -> [B, n_states].  Input transposes may fuse into the pallas_call
    (allow_input_fusion); prefer shallow_fcn_fwd_fm in feature-major models."""
    B, n_states = z.shape
    input_size = x.shape[1]
    tb = _pick_block_b(B, max_block_b=max_block_b)
    call = _build_call(n_states, input_size, B, tb, z.dtype, fuse_inputs=True)
    out_t = call(z.T, x.T, a_weight, b_weight, bias)
    return out_t.T


if __name__ == "__main__":
    # Small feature dims consistent with the module; batch chosen to exercise
    # the multi-step tiled path (B > 2048 -> grid of 4 with a partial last block).
    input_size = 4
    n_states = 8
    batch = 2816

    key = jax.random.PRNGKey(0)
    kz, kx, kaw, kab, kbw, kbb = jax.random.split(key, 6)

    # Deterministic synthetic parameters (PyTorch-style uniform init, then the
    # 0.1 weight scaling as in __init__).
    a_bound = 1.0 / jnp.sqrt(n_states)
    b_bound = 1.0 / jnp.sqrt(input_size)
    a_weight = 0.1 * jax.random.uniform(
        kaw, (n_states, n_states), jnp.float32, -a_bound, a_bound)
    a_bias = jax.random.uniform(kab, (n_states,), jnp.float32, -a_bound, a_bound)
    b_weight = 0.1 * jax.random.uniform(
        kbw, (n_states, input_size), jnp.float32, -b_bound, b_bound)
    b_bias = jax.random.uniform(kbb, (n_states,), jnp.float32, -b_bound, b_bound)

    z = jax.random.normal(kz, (batch, n_states), jnp.float32)
    x = jax.random.normal(kx, (batch, input_size), jnp.float32)

    # Parameter prep happens once, outside the per-call hot path.
    wa, wb, bias = prepare_params(a_weight, a_bias, b_weight, b_bias)

    fwd = jax.jit(shallow_fcn_fwd)
    fwd_fm = jax.jit(shallow_fcn_fwd_fm)

    # Pure-JAX reference (same semantics as the PyTorch forward).
    ref = jnp.maximum(z @ a_weight.T + a_bias + x @ b_weight.T + b_bias, 0.0)

    # 1) Batch-major compat interface, multi-step grid (4 steps, partial last block).
    out = jax.block_until_ready(fwd(z, x, wa, wb, bias))
    assert out.shape == (batch, n_states)
    assert jnp.allclose(out, ref, atol=1e-5, rtol=1e-5)

    # 2) Feature-major fast path (no wrapper layout ops at all), same numerics.
    out_fm = jax.block_until_ready(fwd_fm(z.T, x.T, wa, wb, bias))
    assert out_fm.shape == (n_states, batch)
    assert jnp.allclose(out_fm, ref.T, atol=1e-5, rtol=1e-5)

    # 3) Single-step, lane-dense batch (B <= 2048, multiple of 128).
    out_1k = jax.block_until_ready(fwd(z[:1024], x[:1024], wa, wb, bias))
    assert jnp.allclose(out_1k, ref[:1024], atol=1e-5, rtol=1e-5)

    # 4) Ragged batch (640 = 5*128): single full block, no pad, still lane-dense.
    out_ragged = jax.block_until_ready(fwd(z[:640], x[:640], wa, wb, bias))
    assert jnp.allclose(out_ragged, ref[:640], atol=1e-5, rtol=1e-5)

    # 5) Tiny batch (B=8): single block; masked-store path accepted knowingly.
    out_small = jax.block_until_ready(fwd(z[:8], x[:8], wa, wb, bias))
    assert jnp.allclose(out_small, ref[:8], atol=1e-5, rtol=1e-5)

    print("KERNEL_OK")
</pallas_src>

<mosaic_0001>
module attributes {stable_mosaic.version = 11 : i64} {
  func.func @_fused_kernel(%arg0: i32, %arg1: memref<8x768xf32, #tpu.memory_space<vmem>>, %arg2: memref<4x768xf32, #tpu.memory_space<vmem>>, %arg3: memref<8x8xf32, #tpu.memory_space<vmem>>, %arg4: memref<8x4xf32, #tpu.memory_space<vmem>>, %arg5: memref<8x1xf32, #tpu.memory_space<vmem>>, %arg6: memref<8x768xf32, #tpu.memory_space<vmem>>) attributes {dimension_semantics = [#tpu.dimension_semantics<parallel>], iteration_bounds = array<i64: 4>, scalar_prefetch = 0 : i64, scratch_operands = 0 : i64, tpu.core_type = #tpu.core_type<tc>, window_params = [{transform_indices = @transform_0, window_bounds = array<i64: 8, 768>}, {transform_indices = @transform_1, window_bounds = array<i64: 4, 768>}, {pipeline_mode = #tpu.pipeline_mode<synchronous>, transform_indices = @transform_2, window_bounds = array<i64: 8, 8>}, {pipeline_mode = #tpu.pipeline_mode<synchronous>, transform_indices = @transform_3, window_bounds = array<i64: 8, 4>}, {pipeline_mode = #tpu.pipeline_mode<synchronous>, transform_indices = @transform_4, window_bounds = array<i64: 8, 1>}, {transform_indices = @transform_5, window_bounds = array<i64: 8, 768>}]} {
    %c0 = arith.constant 0 : index
    %c0_0 = arith.constant 0 : index
    %0 = vector.load %arg3[%c0, %c0_0] : memref<8x8xf32, #tpu.memory_space<vmem>>, vector<8x8xf32>
    %c0_1 = arith.constant 0 : index
    %c0_2 = arith.constant 0 : index
    %1 = vector.load %arg1[%c0_1, %c0_2] : memref<8x768xf32, #tpu.memory_space<vmem>>, vector<8x768xf32>
    %cst = arith.constant dense<0.000000e+00> : vector<8x768xf32>
    %2 = tpu.matmul %0, %1, %cst {dimension_numbers = #tpu.dot_dimension_numbers<[1], [0], [0], [1], [0, 0, 1, 1], [], []>} : vector<8x8xf32>, vector<8x768xf32>, vector<8x768xf32> -> vector<8x768xf32>
    %c0_3 = arith.constant 0 : index
    %c0_4 = arith.constant 0 : index
    %3 = vector.load %arg4[%c0_3, %c0_4] : memref<8x4xf32, #tpu.memory_space<vmem>>, vector<8x4xf32>
    %c0_5 = arith.constant 0 : index
    %c0_6 = arith.constant 0 : index
    %4 = vector.load %arg2[%c0_5, %c0_6] : memref<4x768xf32, #tpu.memory_space<vmem>>, vector<4x768xf32>
    %cst_7 = arith.constant dense<0.000000e+00> : vector<8x768xf32>
    %5 = tpu.matmul %3, %4, %cst_7 {dimension_numbers = #tpu.dot_dimension_numbers<[1], [0], [0], [1], [0, 0, 1, 1], [], []>} : vector<8x4xf32>, vector<4x768xf32>, vector<8x768xf32> -> vector<8x768xf32>
    %6 = arith.addf %2, %5 : vector<8x768xf32>
    %c0_8 = arith.constant 0 : index
    %c0_9 = arith.constant 0 : index
    %7 = vector.load %arg5[%c0_8, %c0_9] : memref<8x1xf32, #tpu.memory_space<vmem>>, vector<8x1xf32>
    %8 = vector.broadcast %7 : vector<8x1xf32> to vector<8x768xf32>
    %9 = arith.addf %6, %8 : vector<8x768xf32>
    %cst_10 = arith.constant 0.000000e+00 : f32
    %10 = vector.broadcast %cst_10 : f32 to vector<8x768xf32>
    %11 = arith.maximumf %9, %10 : vector<8x768xf32>
    %c0_11 = arith.constant 0 : index
    %c0_12 = arith.constant 0 : index
    %12 = vector.load %arg6[%c0_11, %c0_12] : memref<8x768xf32, #tpu.memory_space<vmem>>, vector<8x768xf32>
    tpu.vector_store %arg6[%c0_11, %c0_12], %11 {strides = array<i32>} : memref<8x768xf32, #tpu.memory_space<vmem>>, vector<8x768xf32>,
    return
  }
  func.func @transform_0(%arg0: i32) -> (i32, i32) {
    %c0_i32 = arith.constant 0 : i32
    %c0_i32_0 = arith.constant 0 : i32
    return %c0_i32, %arg0 : i32, i32
  }
  func.func @transform_1(%arg0: i32) -> (i32, i32) {
    %c0_i32 = arith.constant 0 : i32
    %c0_i32_0 = arith.constant 0 : i32
    return %c0_i32, %arg0 : i32, i32
  }
  func.func @transform_2(%arg0: i32) -> (i32, i32) {
    %c0_i32 = arith.constant 0 : i32
    %c0_i32_0 = arith.constant 0 : i32
    %c0_i32_1 = arith.constant 0 : i32
    return %c0_i32, %c0_i32_0 : i32, i32
  }
  func.func @transform_3(%arg0: i32) -> (i32, i32) {
    %c0_i32 = arith.constant 0 : i32
    %c0_i32_0 = arith.constant 0 : i32
    %c0_i32_1 = arith.constant 0 : i32
    return %c0_i32, %c0_i32_0 : i32, i32
  }
  func.func @transform_4(%arg0: i32) -> (i32, i32) {
    %c0_i32 = arith.constant 0 : i32
    %c0_i32_0 = arith.constant 0 : i32
    %c0_i32_1 = arith.constant 0 : i32
    return %c0_i32, %c0_i32_0 : i32, i32
  }
  func.func @transform_5(%arg0: i32) -> (i32, i32) {
    %c0_i32 = arith.constant 0 : i32
    %c0_i32_0 = arith.constant 0 : i32
    return %c0_i32, %arg0 : i32, i32
  }
}

</mosaic_0001>

<llo_original>
// kernel: shallow_fcn_fwd.2
$region0: #{shallow_fcn_fwd.2}
  #allocation0 [shape = 'u32[]', space=smem, size = 0x4, offset = 0x4, fixed_abs, tag = 'smem constant byte address 0x4 - core index']
  #allocation1 [shape = 'u32[144,128]{1,0:T(1,128)}', space=vmem, size = 0x12000, scoped, tag = 'internal scratch']
  %s0 = inlined_call_operand.vmem [shape: f32[8,8], index: 0, kind: input, shape index: {}]
  %s1 = inlined_call_operand.vmem [shape: f32[8,4], index: 1, kind: input, shape index: {}]
  %s2 = inlined_call_operand.vmem [shape: f32[8,1], index: 2, kind: input, shape index: {}]
  %s3 = inlined_call_operand.vmem [shape: f32[2816,8], index: 3, kind: input, shape index: {}]
  %s4 = inlined_call_operand.hbm [shape: f32[2816,4], index: 4, kind: input, shape index: {}]
  %s5 = inlined_call_operand.hbm [shape: f32[8,2816], index: 5, kind: output, shape index: {}]
  %s6 = sld [smem:[#allocation0]]
  $region57: #{shallow_fcn_fwd.2} parent=0
    _
  %s8 = ssub.s32 1, %s6
  %s9 = scalar_select 0, %s8, %s6
  $region1: #{shallow_fcn_fwd.2} parent=0
    #allocation2 [shape = 'u8[24576]{0}', space=vmem, size = 0x6000, scoped, tag = 'operand span for operand 4']
    #allocation3 [shape = 's32[2]{0}', space=sflag, size = 0x8, scoped, tag = 'scoped memory for shallow_fcn_fwd.2']
    #allocation4 [shape = 's32[2]{0}', space=sflag, size = 0x8, scoped, tag = 'scoped memory for shallow_fcn_fwd.2']
    #allocation5 [shape = 'u8[49152]{0}', space=vmem, size = 0xc000, scoped, tag = 'output window, operand 0']
    %10 = vsyncpa [#allocation3], 0
    %s11 = scalar_lea.sflag [#allocation3], 1
    %12 = vsyncpa %s11, 0
    %13 = vsyncpa [#allocation4], 0
    %s14 = scalar_lea.sflag [#allocation4], 1
    %15 = vsyncpa %s14, 0
    loop: start=0, step=1, limit=6
    $region2: #{shallow_fcn_fwd.2} parent=1 // loop_pre_header
      _
    $region3: #{shallow_fcn_fwd.2} parent=1 // loop_header
      %s17 = sphi 0, %s21
      %p18 = scmp.ge.s32.totalorder %s17, 6
      %s27 = sphi 0, %s29
      %s30 = sphi 0, %s27
      %s31 = sphi 0, %s30
      %s47 = sphi 0, %s31
      %s53 = sphi 0, %s55
      %s56 = sphi 0, %s53
      %s57 = sphi 0, %s56
      %s73 = sphi 0, %s57
      %s77 = sphi 0, %s77
      %s79 = sphi 0, %s77
      %s80 = sphi 0, %s79
      %s94 = sphi 0, %s80
      %s98 = sphi 0, %s98
      %s100 = sphi 0, %s98
      %s101 = sphi 0, %s100
      %s115 = sphi 0, %s101
      %s119 = sphi 0, %s119
      %s121 = sphi 0, %s119
      %s122 = sphi 0, %s121
      %s136 = sphi 0, %s122
      %s142 = sphi 0, %s144
      %s145 = sphi 0, %s142
      %s146 = sphi 0, %s145
      %s162 = sphi 0, %s146
    $region4: #{shallow_fcn_fwd.2} parent=1 // loop_header_branch
      %20 = sbr.rel (%p18) target = $region8
    $region5: #{shallow_fcn_fwd.2} parent=1 // loop_body
      %s22 = ssub.s32 %s17, 1
      %s23 = ssub.s32 %s17, 2
      %s24 = sadd.s32 %s17, 1
      %s25 = ssub.s32 %s17, %s24
      %p26 = scmp.eq.s32.totalorder %s25, 0
      %s28 = sadd.s32 %s27, 1
      %s29 = scalar_select %p26, %s27, %s28
      %p32 = pneg %p26
      %p33 = scmp.eq.s32.totalorder %s17, 3
      %p34 = por %p32, %p33
      %p35 = scmp.ne.s32.totalorder %s27, %s30
      %p36 = scmp.eq.s32.totalorder %s17, 0
      %p37 = por %p35, %p36
      %p38 = scmp.ne.s32.totalorder %s27, %s30
      %p39 = scmp.eq.s32.totalorder %s22, 3
      %p40 = por %p38, %p39
      %p41 = scmp.ne.s32.totalorder %s30, %s31
      %p42 = scmp.eq.s32.totalorder %s22, 0
      %p43 = por %p41, %p42
      %p44 = scmp.ne.s32.totalorder %s30, %s31
      %p45 = scmp.eq.s32.totalorder %s23, 3
      %p46 = por %p44, %p45
      %p48 = scmp.ne.s32.totalorder %s31, %s47
      %p49 = scmp.eq.s32.totalorder %s23, 0
      %p50 = por %p48, %p49
      %s51 = ssub.s32 %s17, %s24
      %p52 = scmp.eq.s32.totalorder %s51, 0
      %s54 = sadd.s32 %s53, 1
      %s55 = scalar_select %p52, %s53, %s54
      %p58 = pneg %p52
      %p59 = scmp.eq.s32.totalorder %s17, 3
      %p60 = por %p58, %p59
      %p61 = scmp.ne.s32.totalorder %s53, %s56
      %p62 = scmp.eq.s32.totalorder %s17, 0
      %p63 = por %p61, %p62
      %p64 = scmp.ne.s32.totalorder %s53, %s56
      %p65 = scmp.eq.s32.totalorder %s22, 3
      %p66 = por %p64, %p65
      %p67 = scmp.ne.s32.totalorder %s56, %s57
      %p68 = scmp.eq.s32.totalorder %s22, 0
      %p69 = por %p67, %p68
      %p70 = scmp.ne.s32.totalorder %s56, %s57
      %p71 = scmp.eq.s32.totalorder %s23, 3
      %p72 = por %p70, %p71
      %p74 = scmp.ne.s32.totalorder %s57, %s73
      %p75 = scmp.eq.s32.totalorder %s23, 0
      %p76 = por %p74, %p75
      %s78 = sadd.s32 %s77, 1
      %p81 = scmp.eq.s32.totalorder %s17, 3
      %p82 = scmp.ne.s32.totalorder %s77, %s79
      %p83 = scmp.eq.s32.totalorder %s17, 0
      %p84 = por %p82, %p83
      %p85 = scmp.ne.s32.totalorder %s77, %s79
      %p86 = scmp.eq.s32.totalorder %s22, 3
      %p87 = por %p85, %p86
      %p88 = scmp.ne.s32.totalorder %s79, %s80
      %p89 = scmp.eq.s32.totalorder %s22, 0
      %p90 = por %p88, %p89
      %p91 = scmp.ne.s32.totalorder %s79, %s80
      %p92 = scmp.eq.s32.totalorder %s23, 3
      %p93 = por %p91, %p92
      %p95 = scmp.ne.s32.totalorder %s80, %s94
      %p96 = scmp.eq.s32.totalorder %s23, 0
      %p97 = por %p95, %p96
      %s99 = sadd.s32 %s98, 1
      %p102 = scmp.eq.s32.totalorder %s17, 3
      %p103 = scmp.ne.s32.totalorder %s98, %s100
      %p104 = scmp.eq.s32.totalorder %s17, 0
      %p105 = por %p103, %p104
      %p106 = scmp.ne.s32.totalorder %s98, %s100
      %p107 = scmp.eq.s32.totalorder %s22, 3
      %p108 = por %p106, %p107
      %p109 = scmp.ne.s32.totalorder %s100, %s101
      %p110 = scmp.eq.s32.totalorder %s22, 0
      %p111 = por %p109, %p110
      %p112 = scmp.ne.s32.totalorder %s100, %s101
      %p113 = scmp.eq.s32.totalorder %s23, 3
      %p114 = por %p112, %p113
      %p116 = scmp.ne.s32.totalorder %s101, %s115
      %p117 = scmp.eq.s32.totalorder %s23, 0
      %p118 = por %p116, %p117
      %s120 = sadd.s32 %s119, 1
      %p123 = scmp.eq.s32.totalorder %s17, 3
      %p124 = scmp.ne.s32.totalorder %s119, %s121
      %p125 = scmp.eq.s32.totalorder %s17, 0
      %p126 = por %p124, %p125
      %p127 = scmp.ne.s32.totalorder %s119, %s121
      %p128 = scmp.eq.s32.totalorder %s22, 3
      %p129 = por %p127, %p128
      %p130 = scmp.ne.s32.totalorder %s121, %s122
      %p131 = scmp.eq.s32.totalorder %s22, 0
      %p132 = por %p130, %p131
      %p133 = scmp.ne.s32.totalorder %s121, %s122
      %p134 = scmp.eq.s32.totalorder %s23, 3
      %p135 = por %p133, %p134
      %p137 = scmp.ne.s32.totalorder %s122, %s136
      %p138 = scmp.eq.s32.totalorder %s23, 0
      %p139 = por %p137, %p138
      %s140 = ssub.s32 %s17, %s24
      %p141 = scmp.eq.s32.totalorder %s140, 0
      %s143 = sadd.s32 %s142, 1
      %s144 = scalar_select %p141, %s142, %s143
      %p147 = pneg %p141
      %p148 = scmp.eq.s32.totalorder %s17, 3
      %p149 = por %p147, %p148
      %p150 = scmp.ne.s32.totalorder %s142, %s145
      %p151 = scmp.eq.s32.totalorder %s17, 0
      %p152 = por %p150, %p151
      %p153 = scmp.ne.s32.totalorder %s142, %s145
      %p154 = scmp.eq.s32.totalorder %s22, 3
      %p155 = por %p153, %p154
      %p156 = scmp.ne.s32.totalorder %s145, %s146
      %p157 = scmp.eq.s32.totalorder %s22, 0
      %p158 = por %p156, %p157
      %p159 = scmp.ne.s32.totalorder %s145, %s146
      %p160 = scmp.eq.s32.totalorder %s23, 3
      %p161 = por %p159, %p160
      %p163 = scmp.ne.s32.totalorder %s146, %s162
      %p164 = scmp.eq.s32.totalorder %s23, 0
      %p165 = por %p163, %p164
      %p166 = scmp.le.s32.totalorder 1, %s17
      %p167 = scmp.lt.s32.totalorder %s17, 5
      %p168 = pnand %p166, %p167
      %p169 = pneg %p168
      // Predicated region
      $region9: #{shallow_fcn_fwd.2} parent=5 // pred_check
        _
      $region10: #{shallow_fcn_fwd.2} parent=5 // pred_check_branch
        %171 = sbr.rel (%p168) target = $region12
      $region11: #{shallow_fcn_fwd.2} parent=5 // pred_region
        %s172 = ssub.s32 %s17, 1
        // Predicated region
        $region13: #{shallow_fcn_fwd.2} parent=11 // pred_check
          %p173 = pneg %p90
        $region14: #{shallow_fcn_fwd.2} parent=11 // pred_check_branch
          %175 = sbr.rel (%p173) target = $region16
        $region15: #{shallow_fcn_fwd.2} parent=11 // pred_region
          _
        $region16: #{shallow_fcn_fwd.2} parent=11 // pred_fallthru
          _
        // Predicated region
        $region17: #{shallow_fcn_fwd.2} parent=11 // pred_check
          %p176 = pneg %p111
        $region18: #{shallow_fcn_fwd.2} parent=11 // pred_check_branch
          %178 = sbr.rel (%p176) target = $region20
        $region19: #{shallow_fcn_fwd.2} parent=11 // pred_region
          _
        $region20: #{shallow_fcn_fwd.2} parent=11 // pred_fallthru
          _
        // Predicated region
        $region21: #{shallow_fcn_fwd.2} parent=11 // pred_check
          %p179 = pneg %p132
        $region22: #{shallow_fcn_fwd.2} parent=11 // pred_check_branch
          %181 = sbr.rel (%p179) target = $region24
        $region23: #{shallow_fcn_fwd.2} parent=11 // pred_region
          _
        $region24: #{shallow_fcn_fwd.2} parent=11 // pred_fallthru
          _
      $region12: #{shallow_fcn_fwd.2} parent=5 // pred_fallthru
        _
      %p182 = scmp.lt.s32.totalorder %s17, 4
      // Predicated region
      $region25: #{shallow_fcn_fwd.2} parent=5 // pred_check
        %p183 = pneg %p182
      $region26: #{shallow_fcn_fwd.2} parent=5 // pred_check_branch
        %185 = sbr.rel (%p183) target = $region28
      $region27: #{shallow_fcn_fwd.2} parent=5 // pred_region
        // Predicated region
        $region29: #{shallow_fcn_fwd.2} parent=27 // pred_check
          %p186 = pneg %p37
        $region30: #{shallow_fcn_fwd.2} parent=27 // pred_check_branch
          %188 = sbr.rel (%p186) target = $region32
        $region31: #{shallow_fcn_fwd.2} parent=27 // pred_region
          %s189 = smul.u32 6, %s17
          %s190 = ssub.s32 22, %s189
          %p191 = scmp.lt.s32.totalorder %s190, 6
          %s192 = scalar_select %p191, %s190, 6
          %s193 = smul.u32 128, %s192
          %p194 = scmp.lt.s32.totalorder %s189, 21
          %s195 = scalar_select %p194, %s189, 21
          %s196 = smul.addr %s195, 8
          %s197 = scalar_lea.vmem %s3, %s196
          %s198 = smul.u32 6, %s17
          %s199 = ssub.s32 22, %s198
          %p200 = scmp.lt.s32.totalorder %s199, 6
          %s201 = scalar_select %p200, %s199, 6
          %s202 = smul.u32 128, %s201
        $region32: #{shallow_fcn_fwd.2} parent=27 // pred_fallthru
          _
        // Predicated region
        $region33: #{shallow_fcn_fwd.2} parent=27 // pred_check
          %p203 = pneg %p63
        $region34: #{shallow_fcn_fwd.2} parent=27 // pred_check_branch
          %205 = sbr.rel (%p203) target = $region36
        $region35: #{shallow_fcn_fwd.2} parent=27 // pred_region
          %s206 = sand.u32 %s53, 1
          %s207 = scalar_lea.sflag [#allocation3], %s206
          %s208 = sand.u32 %s53, 1
          %s209 = smul.addr %s208, 24
          %s210 = scalar_lea.vmem [#allocation2], %s209
          %s211 = smul.u32 6, %s17
          %s212 = ssub.s32 22, %s211
          %p213 = scmp.lt.s32.totalorder %s212, 6
          %s214 = scalar_select %p213, %s212, 6
          %s215 = smul.u32 64, %s214
          %s217 = ssub.s32 384, %s215
          %218 = vsyncadd %s207, %s217
          %p219 = scmp.ne.s32.totalorder 0, %s215
          %s220 = smul.addr %s211, 64
          %s221 = scalar_lea.hbm %s4, %s220
          %s222 = smul.u32 %s214, 4
          %s223 = sshll.u32 %s222, 4
          %s224 = sshll.u32 %s210, 4
          %s225 = int_to_ptr.vmem [resolvable:$true] %s224
          %227 = dma.hbm_to_vmem [thread:$0]  (%p219), %s221, %s223, %s225, %s207
        $region36: #{shallow_fcn_fwd.2} parent=27 // pred_fallthru
          _
      $region28: #{shallow_fcn_fwd.2} parent=5 // pred_fallthru
        _
      %p228 = scmp.le.s32.totalorder 1, %s17
      %p229 = scmp.lt.s32.totalorder %s17, 5
      %p230 = pnand %p228, %p229
      %p231 = pneg %p230
      // Predicated region
      $region37: #{shallow_fcn_fwd.2} parent=5 // pred_check
        _
      $region38: #{shallow_fcn_fwd.2} parent=5 // pred_check_branch
        %233 = sbr.rel (%p230) target = $region40
      $region39: #{shallow_fcn_fwd.2} parent=5 // pred_region
        #allocation6 [shape = 'u8[24576]{0}', space=vmem, size = 0x6000, dematerialized = true, scoped, tag = 'FusionAdapter Buffer %fusion.1 = f32[8,2816]{1,0:T(8,128)} fusion(%param_3.2), kind=kLoop, calls=%fused_computation.1.clone, metadata={op_name="jit(shallow_fcn_fwd)/transpose" stack_frame_id=7}']
        #allocation7 [shape = 'u8[12288]{0}', space=vmem, size = 0x3000, dematerialized = true, scoped, tag = 'FusionAdapter Buffer %fusion.2 = f32[4,2816]{1,0:T(4,128)} fusion(%param_4.2), kind=kLoop, calls=%fused_computation.2.clone, metadata={op_name="jit(shallow_fcn_fwd)/transpose" stack_frame_id=8}']
        %s234 = ssub.s32 %s17, 1
        %s235 = sand.u32 %s56, 1
        %s236 = scalar_lea.sflag [#allocation3], %s235
        %s237 = sand.u32 %s56, 1
        %s238 = smul.addr %s237, 24
        %s239 = scalar_lea.vmem [#allocation2], %s238
        // Predicated region
        $region41: #{shallow_fcn_fwd.2} parent=39 // pred_check
          %p240 = pneg %p69
        $region42: #{shallow_fcn_fwd.2} parent=39 // pred_check_branch
          %242 = sbr.rel (%p240) target = $region44
        $region43: #{shallow_fcn_fwd.2} parent=39 // pred_region
          %243 = dma.done %s236, 384
        $region44: #{shallow_fcn_fwd.2} parent=39 // pred_fallthru
          _
        %s244 = smul.u32 6, %s22
        %s245 = ssub.s32 22, %s244
        %p246 = scmp.lt.s32.totalorder %s245, 6
        %s247 = scalar_select %p246, %s245, 6
        %s248 = smul.u32 128, %s247
        %p249 = scmp.lt.s32.totalorder %s244, 21
        %s250 = scalar_select %p249, %s244, 21
        %s251 = smul.addr %s250, 8
        %s252 = scalar_lea.vmem %s3, %s251
        %p253 = pneg %p43
        %p254 = pneg %p40
        %s255 = sand.u32 %s56, 1
        %s256 = scalar_lea.sflag [#allocation3], %s255
        %s257 = sand.u32 %s56, 1
        %s258 = smul.addr %s257, 24
        %s259 = scalar_lea.vmem [#allocation2], %s258
        %p260 = pneg %p69
        %p261 = pneg %p66
        %p262 = pneg %p90
        %p263 = pneg %p87
        %p264 = pneg %p111
        %p265 = pneg %p108
        %p266 = pneg %p132
        %p267 = pneg %p129
        %p268 = pneg %p158
        %p269 = pneg %p155
        %s270 = sand.u32 %s145, 1
        %s271 = scalar_lea.sflag [#allocation4], %s270
        %s272 = sand.u32 %s145, 1
        %s273 = smul.addr %s272, 48
        %s274 = scalar_lea.vmem [#allocation5], %s273
        %s275 = smul.u32 6, %s22
        %s276 = ssub.s32 22, %s275
        %p277 = scmp.lt.s32.totalorder %s276, 6
        %s278 = scalar_select %p277, %s276, 6
        %s279 = smul.u32 128, %s278
        %p280 = scmp.lt.s32.totalorder %s275, 21
        %s281 = scalar_select %p280, %s275, 21
        %s282 = smul.addr %s281, 8
        %s283 = scalar_lea.vmem %s3, %s282
        %s284 = smul.u32 6, %s22
        %s285 = ssub.s32 22, %s284
        %p286 = scmp.lt.s32.totalorder %s285, 6
        %s287 = scalar_select %p286, %s285, 6
        %s288 = smul.u32 128, %s287
        %s289 = smul.u32 6, %s22
        %s290 = ssub.s32 22, %s289
        %p291 = scmp.lt.s32.totalorder %s290, 6
        %s292 = scalar_select %p291, %s290, 6
        %s293 = smul.u32 64, %s292
        %s294 = smul.u32 6, %s22
        %s295 = ssub.s32 22, %s294
        %p296 = scmp.lt.s32.totalorder %s295, 6
        %s297 = scalar_select %p296, %s295, 6
        %s298 = smul.u32 128, %s297
        %v299 = vld [vmem:[%s283] sm:$0xff]
        %301 = vst [vmem:[#allocation6] sm:$0xff] %v299
        %s302 = scalar_lea.vmem %s283, 8
        %v303 = vld [vmem:[%s302] sm:$0xff]
        %s304 = scalar_lea.vmem [#allocation6], 8
        %306 = vst [vmem:[%s304] sm:$0xff] %v303
        %s307 = scalar_lea.vmem %s283, 16
        %v308 = vld [vmem:[%s307] sm:$0xff]
        %s309 = scalar_lea.vmem [#allocation6], 16
        %311 = vst [vmem:[%s309] sm:$0xff] %v308
        %s312 = scalar_lea.vmem %s283, 24
        %v313 = vld [vmem:[%s312] sm:$0xff]
        %s314 = scalar_lea.vmem [#allocation6], 24
        %316 = vst [vmem:[%s314] sm:$0xff] %v313
        %s317 = scalar_lea.vmem %s283, 32
        %s318 = sadd.s32 %s284, 4
        %s319 = ssub.s32 21, %s318
        %p320 = scmp.lt.s32.totalorder %s319, 0
        %s321 = scalar_select %p320, 0, 255
        %v322 = vld [vmem:[%s317] sm:%s321]
        %s323 = scalar_lea.vmem [#allocation6], 32
        %325 = vst [vmem:[%s323] sm:$0xff] %v322
        %s326 = scalar_lea.vmem %s283, 40
        %s327 = sadd.s32 %s284, 5
        %s328 = ssub.s32 21, %s327
        %p329 = scmp.lt.s32.totalorder %s328, 0
        %s330 = scalar_select %p329, 0, 255
        %v331 = vld [vmem:[%s326] sm:%s330]
        %s332 = scalar_lea.vmem [#allocation6], 40
        %334 = vst [vmem:[%s332] sm:$0xff] %v331
        %v335 = vld [vmem:[%s239] sm:$0xf]
        %337 = vst [vmem:[#allocation7] sm:$0xf] %v335
        %s338 = scalar_lea.vmem %s239, 4 [#allocation2]
        %v339 = vld [vmem:[%s338] sm:$0xf]
        %s340 = scalar_lea.vmem [#allocation7], 4
        %342 = vst [vmem:[%s340] sm:$0xf] %v339
        %s343 = scalar_lea.vmem %s239, 8 [#allocation2]
        %v344 = vld [vmem:[%s343] sm:$0xf]
        %s345 = scalar_lea.vmem [#allocation7], 8
        %347 = vst [vmem:[%s345] sm:$0xf] %v344
        %s348 = scalar_lea.vmem %s239, 12 [#allocation2]
        %v349 = vld [vmem:[%s348] sm:$0xf]
        %s350 = scalar_lea.vmem [#allocation7], 12
        %352 = vst [vmem:[%s350] sm:$0xf] %v349
        %s353 = scalar_lea.vmem %s239, 16 [#allocation2]
        %v354 = vld [vmem:[%s353] sm:$0xf]
        %s355 = scalar_lea.vmem [#allocation7], 16
        %357 = vst [vmem:[%s355] sm:$0xf] %v354
        %s358 = scalar_lea.vmem %s239, 20 [#allocation2]
        %v359 = vld [vmem:[%s358] sm:$0xf]
        %s360 = scalar_lea.vmem [#allocation7], 20
        %362 = vst [vmem:[%s360] sm:$0xf] %v359
        %v363 = vld [vmem:[%s0] sm:$0xff]
        %v364 = vld [vmem:[#allocation6] sm:$0xff]
        %v365 = vld [vmem:[#allocation6 + $0x8] sm:$0xff]
        %v366 = vld [vmem:[#allocation6 + $0x10] sm:$0xff]
        %v367 = vld [vmem:[#allocation6 + $0x18] sm:$0xff]
        %v368 = vld [vmem:[#allocation6 + $0x20] sm:$0xff]
        %v369 = vld [vmem:[#allocation6 + $0x28] sm:$0xff]
        %v370 = vld [vmem:[%s1] sm:$0xff]
        %v371 = vld [vmem:[#allocation7] sm:$0xff]
        %v372 = vld [vmem:[#allocation7 + $0x8] sm:$0xff]
        %v373 = vld [vmem:[#allocation7 + $0x10] sm:$0xff]
        %v377 = vcombine.high %v371, %v371
        %v378 = vcombine.high %v372, %v372
        %v379 = vcombine.high %v373, %v373
        %vm380 = vcmask 31744
        %v382 = vsel %vm380, %v370, 0
        %vm384 = vcmask 1043456
        %v385 = vsel %vm384, %v371, 0
        %v387 = vsel %vm384, %v377, 0
        %v389 = vsel %vm384, %v372, 0
        %v391 = vsel %vm384, %v378, 0
        %v393 = vsel %vm384, %v373, 0
        %v395 = vsel %vm384, %v379, 0
        %397 = vmatprep.subr.mxu0 %v387
        %398 = vmatpush1.msra.mxu0 %v385
        %399 = vmatprep.subr.mxu0 0.0
        %400 = vmatpush1.msra.mxu0 0.0
        %401 = vmatprep.subr.mxu0 0.0
        %402 = vmatpush1.msra.mxu0 0.0
        %403 = vmatprep.subr.mxu0 0.0
        %404 = vmatpush1.msra.mxu0 0.0
        %405 = vmatprep.subr.mxu0 0.0
        %406 = vmatpush1.msra.mxu0 0.0
        %407 = vmatprep.subr.mxu0 0.0
        %408 = vmatpush1.msra.mxu0 0.0
        %409 = vmatprep.subr.mxu0 0.0
        %410 = vmatpush1.msra.mxu0 0.0
        %411 = vmatprep.subr.mxu0 0.0
        %412 = vmatpush1.msra.mxu0 0.0
        %413 = vmatprep.subr.mxu0 0.0
        %414 = vmatpush1.msra.mxu0 0.0
        %415 = vmatprep.subr.mxu0 0.0
        %416 = vmatpush1.msra.mxu0 0.0
        %417 = vmatprep.subr.mxu0 0.0
        %418 = vmatpush1.msra.mxu0 0.0
        %419 = vmatprep.subr.mxu0 0.0
        %420 = vmatpush1.msra.mxu0 0.0
        %421 = vmatprep.subr.mxu0 0.0
        %422 = vmatpush1.msra.mxu0 0.0
        %423 = vmatprep.subr.mxu0 0.0
        %424 = vmatpush1.msra.mxu0 0.0
        %425 = vmatprep.subr.mxu0 0.0
        %426 = vmatpush1.msra.mxu0 0.0
        %427 = vmatprep.subr.mxu0 0.0
        %428 = vmatpush1.msra.mxu0 0.0
        %429 = vmatprep.subr.mxu0 0.0
        %430 = vmatpush1.msra.mxu0 0.0
        %431 = vmatprep.subr.mxu0 0.0
        %432 = vmatpush1.msra.mxu0 0.0
        %433 = vmatprep.subr.mxu0 0.0
        %434 = vmatpush1.msra.mxu0 0.0
        %435 = vmatprep.subr.mxu0 0.0
        %436 = vmatpush1.msra.mxu0 0.0
        %437 = vmatprep.subr.mxu0 0.0
        %438 = vmatpush1.msra.mxu0 0.0
        %439 = vmatprep.subr.mxu0 0.0
        %440 = vmatpush1.msra.mxu0 0.0
        %441 = vmatprep.subr.mxu0 0.0
        %442 = vmatpush1.msra.mxu0 0.0
        %443 = vmatprep.subr.mxu0 0.0
        %444 = vmatpush1.msra.mxu0 0.0
        %445 = vmatprep.subr.mxu0 0.0
        %446 = vmatpush1.msra.mxu0 0.0
        %447 = vmatprep.subr.mxu0 0.0
        %448 = vmatpush1.msra.mxu0 0.0
        %449 = vmatprep.subr.mxu0 0.0
        %450 = vmatpush1.msra.mxu0 0.0
        %451 = vmatprep.subr.mxu0 0.0
        %452 = vmatpush1.msra.mxu0 0.0
        %453 = vmatprep.subr.mxu0 0.0
        %454 = vmatpush1.msra.mxu0 0.0
        %455 = vmatprep.subr.mxu0 0.0
        %456 = vmatpush1.msra.mxu0 0.0
        %457 = vmatprep.subr.mxu0 0.0
        %458 = vmatpush1.msra.mxu0 0.0
        %459 = vmatprep.subr.mxu0 0.0
        %460 = vmatpush1.msra.mxu0 0.0
        %461 = vmatprep.mubr.f32.mxu0 0.0
        %462 = vmatmul.mubr.f32.gmra.mrb[0].mxu0 %v382
        %v463 = vpop.f32.mrb[0].mxu0
        %v464 = vadd.f32 0.0, %v463
        %v465 = vpop.f32.mrb[0].mxu0
        %v466 = vadd.f32 0.0, %v465
        %467 = vdwg.mxu0
        %468 = vmatprep.subr.mxu0 %v391
        %469 = vmatpush1.msra.mxu0 %v389
        %470 = vmatprep.subr.mxu0 0.0
        %471 = vmatpush1.msra.mxu0 0.0
        %472 = vmatprep.subr.mxu0 0.0
        %473 = vmatpush1.msra.mxu0 0.0
        %474 = vmatprep.subr.mxu0 0.0
        %475 = vmatpush1.msra.mxu0 0.0
        %476 = vmatprep.subr.mxu0 0.0
        %477 = vmatpush1.msra.mxu0 0.0
        %478 = vmatprep.subr.mxu0 0.0
        %479 = vmatpush1.msra.mxu0 0.0
        %480 = vmatprep.subr.mxu0 0.0
        %481 = vmatpush1.msra.mxu0 0.0
        %482 = vmatprep.subr.mxu0 0.0
        %483 = vmatpush1.msra.mxu0 0.0
        %484 = vmatprep.subr.mxu0 0.0
        %485 = vmatpush1.msra.mxu0 0.0
        %486 = vmatprep.subr.mxu0 0.0
        %487 = vmatpush1.msra.mxu0 0.0
        %488 = vmatprep.subr.mxu0 0.0
        %489 = vmatpush1.msra.mxu0 0.0
        %490 = vmatprep.subr.mxu0 0.0
        %491 = vmatpush1.msra.mxu0 0.0
        %492 = vmatprep.subr.mxu0 0.0
        %493 = vmatpush1.msra.mxu0 0.0
        %494 = vmatprep.subr.mxu0 0.0
        %495 = vmatpush1.msra.mxu0 0.0
        %496 = vmatprep.subr.mxu0 0.0
        %497 = vmatpush1.msra.mxu0 0.0
        %498 = vmatprep.subr.mxu0 0.0
        %499 = vmatpush1.msra.mxu0 0.0
        %500 = vmatprep.subr.mxu0 0.0
        %501 = vmatpush1.msra.mxu0 0.0
        %502 = vmatprep.subr.mxu0 0.0
        %503 = vmatpush1.msra.mxu0 0.0
        %504 = vmatprep.subr.mxu0 0.0
        %505 = vmatpush1.msra.mxu0 0.0
        %506 = vmatprep.subr.mxu0 0.0
        %507 = vmatpush1.msra.mxu0 0.0
        %508 = vmatprep.subr.mxu0 0.0
        %509 = vmatpush1.msra.mxu0 0.0
        %510 = vmatprep.subr.mxu0 0.0
        %511 = vmatpush1.msra.mxu0 0.0
        %512 = vmatprep.subr.mxu0 0.0
        %513 = vmatpush1.msra.mxu0 0.0
        %514 = vmatprep.subr.mxu0 0.0
        %515 = vmatpush1.msra.mxu0 0.0
        %516 = vmatprep.subr.mxu0 0.0
        %517 = vmatpush1.msra.mxu0 0.0
        %518 = vmatprep.subr.mxu0 0.0
        %519 = vmatpush1.msra.mxu0 0.0
        %520 = vmatprep.subr.mxu0 0.0
        %521 = vmatpush1.msra.mxu0 0.0
        %522 = vmatprep.subr.mxu0 0.0
        %523 = vmatpush1.msra.mxu0 0.0
        %524 = vmatprep.subr.mxu0 0.0
        %525 = vmatpush1.msra.mxu0 0.0
        %526 = vmatprep.subr.mxu0 0.0
        %527 = vmatpush1.msra.mxu0 0.0
        %528 = vmatprep.subr.mxu0 0.0
        %529 = vmatpush1.msra.mxu0 0.0
        %530 = vmatprep.subr.mxu0 0.0
        %531 = vmatpush1.msra.mxu0 0.0
        %532 = vmatprep.mubr.f32.mxu0 0.0
        %533 = vmatmul.mubr.f32.gmra.mrb[0].mxu0 %v382
        %v534 = vpop.f32.mrb[0].mxu0
        %v535 = vadd.f32 0.0, %v534
        %v536 = vpop.f32.mrb[0].mxu0
        %v537 = vadd.f32 0.0, %v536
        %538 = vdwg.mxu0
        %539 = vmatprep.subr.mxu0 %v395
        %540 = vmatpush1.msra.mxu0 %v393
        %541 = vmatprep.subr.mxu0 0.0
        %542 = vmatpush1.msra.mxu0 0.0
        %543 = vmatprep.subr.mxu0 0.0
        %544 = vmatpush1.msra.mxu0 0.0
        %545 = vmatprep.subr.mxu0 0.0
        %546 = vmatpush1.msra.mxu0 0.0
        %547 = vmatprep.subr.mxu0 0.0
        %548 = vmatpush1.msra.mxu0 0.0
        %549 = vmatprep.subr.mxu0 0.0
        %550 = vmatpush1.msra.mxu0 0.0
        %551 = vmatprep.subr.mxu0 0.0
        %552 = vmatpush1.msra.mxu0 0.0
        %553 = vmatprep.subr.mxu0 0.0
        %554 = vmatpush1.msra.mxu0 0.0
        %555 = vmatprep.subr.mxu0 0.0
        %556 = vmatpush1.msra.mxu0 0.0
        %557 = vmatprep.subr.mxu0 0.0
        %558 = vmatpush1.msra.mxu0 0.0
        %559 = vmatprep.subr.mxu0 0.0
        %560 = vmatpush1.msra.mxu0 0.0
        %561 = vmatprep.subr.mxu0 0.0
        %562 = vmatpush1.msra.mxu0 0.0
        %563 = vmatprep.subr.mxu0 0.0
        %564 = vmatpush1.msra.mxu0 0.0
        %565 = vmatprep.subr.mxu0 0.0
        %566 = vmatpush1.msra.mxu0 0.0
        %567 = vmatprep.subr.mxu0 0.0
        %568 = vmatpush1.msra.mxu0 0.0
        %569 = vmatprep.subr.mxu0 0.0
        %570 = vmatpush1.msra.mxu0 0.0
        %571 = vmatprep.subr.mxu0 0.0
        %572 = vmatpush1.msra.mxu0 0.0
        %573 = vmatprep.subr.mxu0 0.0
        %574 = vmatpush1.msra.mxu0 0.0
        %575 = vmatprep.subr.mxu0 0.0
        %576 = vmatpush1.msra.mxu0 0.0
        %577 = vmatprep.subr.mxu0 0.0
        %578 = vmatpush1.msra.mxu0 0.0
        %579 = vmatprep.subr.mxu0 0.0
        %580 = vmatpush1.msra.mxu0 0.0
        %581 = vmatprep.subr.mxu0 0.0
        %582 = vmatpush1.msra.mxu0 0.0
        %583 = vmatprep.subr.mxu0 0.0
        %584 = vmatpush1.msra.mxu0 0.0
        %585 = vmatprep.subr.mxu0 0.0
        %586 = vmatpush1.msra.mxu0 0.0
        %587 = vmatprep.subr.mxu0 0.0
        %588 = vmatpush1.msra.mxu0 0.0
        %589 = vmatprep.subr.mxu0 0.0
        %590 = vmatpush1.msra.mxu0 0.0
        %591 = vmatprep.subr.mxu0 0.0
        %592 = vmatpush1.msra.mxu0 0.0
        %593 = vmatprep.subr.mxu0 0.0
        %594 = vmatpush1.msra.mxu0 0.0
        %595 = vmatprep.subr.mxu0 0.0
        %596 = vmatpush1.msra.mxu0 0.0
        %597 = vmatprep.subr.mxu0 0.0
        %598 = vmatpush1.msra.mxu0 0.0
        %599 = vmatprep.subr.mxu0 0.0
        %600 = vmatpush1.msra.mxu0 0.0
        %601 = vmatprep.subr.mxu0 0.0
        %602 = vmatpush1.msra.mxu0 0.0
        %603 = vmatprep.mubr.f32.mxu0 0.0
        %604 = vmatmul.mubr.f32.gmra.mrb[0].mxu0 %v382
        %v605 = vpop.f32.mrb[0].mxu0
        %v606 = vadd.f32 0.0, %v605
        %v607 = vpop.f32.mrb[0].mxu0
        %v608 = vadd.f32 0.0, %v607
        %609 = vdwg.mxu0
        %vm610 = vcmask 64512
        %v612 = vsel %vm610, %v363, 0
        %614 = vmatprep.subr.mxu0 %v365
        %615 = vmatpush1.msra.mxu0 %v364
        %616 = vmatprep.subr.mxu0 0.0
        %617 = vmatpush1.msra.mxu0 0.0
        %618 = vmatprep.subr.mxu0 0.0
        %619 = vmatpush1.msra.mxu0 0.0
        %620 = vmatprep.subr.mxu0 0.0
        %621 = vmatpush1.msra.mxu0 0.0
        %622 = vmatprep.subr.mxu0 0.0
        %623 = vmatpush1.msra.mxu0 0.0
        %624 = vmatprep.subr.mxu0 0.0
        %625 = vmatpush1.msra.mxu0 0.0
        %626 = vmatprep.subr.mxu0 0.0
        %627 = vmatpush1.msra.mxu0 0.0
        %628 = vmatprep.subr.mxu0 0.0
        %629 = vmatpush1.msra.mxu0 0.0
        %630 = vmatprep.subr.mxu0 0.0
        %631 = vmatpush1.msra.mxu0 0.0
        %632 = vmatprep.subr.mxu0 0.0
        %633 = vmatpush1.msra.mxu0 0.0
        %634 = vmatprep.subr.mxu0 0.0
        %635 = vmatpush1.msra.mxu0 0.0
        %636 = vmatprep.subr.mxu0 0.0
        %637 = vmatpush1.msra.mxu0 0.0
        %638 = vmatprep.subr.mxu0 0.0
        %639 = vmatpush1.msra.mxu0 0.0
        %640 = vmatprep.subr.mxu0 0.0
        %641 = vmatpush1.msra.mxu0 0.0
        %642 = vmatprep.subr.mxu0 0.0
        %643 = vmatpush1.msra.mxu0 0.0
        %644 = vmatprep.subr.mxu0 0.0
        %645 = vmatpush1.msra.mxu0 0.0
        %646 = vmatprep.subr.mxu0 0.0
        %647 = vmatpush1.msra.mxu0 0.0
        %648 = vmatprep.subr.mxu0 0.0
        %649 = vmatpush1.msra.mxu0 0.0
        %650 = vmatprep.subr.mxu0 0.0
        %651 = vmatpush1.msra.mxu0 0.0
        %652 = vmatprep.subr.mxu0 0.0
        %653 = vmatpush1.msra.mxu0 0.0
        %654 = vmatprep.subr.mxu0 0.0
        %655 = vmatpush1.msra.mxu0 0.0
        %656 = vmatprep.subr.mxu0 0.0
        %657 = vmatpush1.msra.mxu0 0.0
        %658 = vmatprep.subr.mxu0 0.0
        %659 = vmatpush1.msra.mxu0 0.0
        %660 = vmatprep.subr.mxu0 0.0
        %661 = vmatpush1.msra.mxu0 0.0
        %662 = vmatprep.subr.mxu0 0.0
        %663 = vmatpush1.msra.mxu0 0.0
        %664 = vmatprep.subr.mxu0 0.0
        %665 = vmatpush1.msra.mxu0 0.0
        %666 = vmatprep.subr.mxu0 0.0
        %667 = vmatpush1.msra.mxu0 0.0
        %668 = vmatprep.subr.mxu0 0.0
        %669 = vmatpush1.msra.mxu0 0.0
        %670 = vmatprep.subr.mxu0 0.0
        %671 = vmatpush1.msra.mxu0 0.0
        %672 = vmatprep.subr.mxu0 0.0
        %673 = vmatpush1.msra.mxu0 0.0
        %674 = vmatprep.subr.mxu0 0.0
        %675 = vmatpush1.msra.mxu0 0.0
        %676 = vmatprep.subr.mxu0 0.0
        %677 = vmatpush1.msra.mxu0 0.0
        %678 = vmatprep.mubr.f32.mxu0 0.0
        %679 = vmatmul.mubr.f32.gmra.mrb[0].mxu0 %v612
        %v680 = vpop.f32.mrb[0].mxu0
        %v681 = vadd.f32 %v464, %v680
        %v682 = vpop.f32.mrb[0].mxu0
        %v683 = vadd.f32 %v466, %v682
        %684 = vdwg.mxu0
        %685 = vmatprep.subr.mxu0 %v367
        %686 = vmatpush1.msra.mxu0 %v366
        %687 = vmatprep.subr.mxu0 0.0
        %688 = vmatpush1.msra.mxu0 0.0
        %689 = vmatprep.subr.mxu0 0.0
        %690 = vmatpush1.msra.mxu0 0.0
        %691 = vmatprep.subr.mxu0 0.0
        %692 = vmatpush1.msra.mxu0 0.0
        %693 = vmatprep.subr.mxu0 0.0
        %694 = vmatpush1.msra.mxu0 0.0
        %695 = vmatprep.subr.mxu0 0.0
        %696 = vmatpush1.msra.mxu0 0.0
        %697 = vmatprep.subr.mxu0 0.0
        %698 = vmatpush1.msra.mxu0 0.0
        %699 = vmatprep.subr.mxu0 0.0
        %700 = vmatpush1.msra.mxu0 0.0
        %701 = vmatprep.subr.mxu0 0.0
        %702 = vmatpush1.msra.mxu0 0.0
        %703 = vmatprep.subr.mxu0 0.0
        %704 = vmatpush1.msra.mxu0 0.0
        %705 = vmatprep.subr.mxu0 0.0
        %706 = vmatpush1.msra.mxu0 0.0
        %707 = vmatprep.subr.mxu0 0.0
        %708 = vmatpush1.msra.mxu0 0.0
        %709 = vmatprep.subr.mxu0 0.0
        %710 = vmatpush1.msra.mxu0 0.0
        %711 = vmatprep.subr.mxu0 0.0
        %712 = vmatpush1.msra.mxu0 0.0
        %713 = vmatprep.subr.mxu0 0.0
        %714 = vmatpush1.msra.mxu0 0.0
        %715 = vmatprep.subr.mxu0 0.0
        %716 = vmatpush1.msra.mxu0 0.0
        %717 = vmatprep.subr.mxu0 0.0
        %718 = vmatpush1.msra.mxu0 0.0
        %719 = vmatprep.subr.mxu0 0.0
        %720 = vmatpush1.msra.mxu0 0.0
        %721 = vmatprep.subr.mxu0 0.0
        %722 = vmatpush1.msra.mxu0 0.0
        %723 = vmatprep.subr.mxu0 0.0
        %724 = vmatpush1.msra.mxu0 0.0
        %725 = vmatprep.subr.mxu0 0.0
        %726 = vmatpush1.msra.mxu0 0.0
        %727 = vmatprep.subr.mxu0 0.0
        %728 = vmatpush1.msra.mxu0 0.0
        %729 = vmatprep.subr.mxu0 0.0
        %730 = vmatpush1.msra.mxu0 0.0
        %731 = vmatprep.subr.mxu0 0.0
        %732 = vmatpush1.msra.mxu0 0.0
        %733 = vmatprep.subr.mxu0 0.0
        %734 = vmatpush1.msra.mxu0 0.0
        %735 = vmatprep.subr.mxu0 0.0
        %736 = vmatpush1.msra.mxu0 0.0
        %737 = vmatprep.subr.mxu0 0.0
        %738 = vmatpush1.msra.mxu0 0.0
        %739 = vmatprep.subr.mxu0 0.0
        %740 = vmatpush1.msra.mxu0 0.0
        %741 = vmatprep.subr.mxu0 0.0
        %742 = vmatpush1.msra.mxu0 0.0
        %743 = vmatprep.subr.mxu0 0.0
        %744 = vmatpush1.msra.mxu0 0.0
        %745 = vmatprep.subr.mxu0 0.0
        %746 = vmatpush1.msra.mxu0 0.0
        %747 = vmatprep.subr.mxu0 0.0
        %748 = vmatpush1.msra.mxu0 0.0
        %749 = vmatprep.mubr.f32.mxu0 0.0
        %750 = vmatmul.mubr.f32.gmra.mrb[0].mxu0 %v612
        %v751 = vpop.f32.mrb[0].mxu0
        %v752 = vadd.f32 %v535, %v751
        %v753 = vpop.f32.mrb[0].mxu0
        %v754 = vadd.f32 %v537, %v753
        %755 = vdwg.mxu0
        %756 = vmatprep.subr.mxu0 %v369
        %757 = vmatpush1.msra.mxu0 %v368
        %758 = vmatprep.subr.mxu0 0.0
        %759 = vmatpush1.msra.mxu0 0.0
        %760 = vmatprep.subr.mxu0 0.0
        %761 = vmatpush1.msra.mxu0 0.0
        %762 = vmatprep.subr.mxu0 0.0
        %763 = vmatpush1.msra.mxu0 0.0
        %764 = vmatprep.subr.mxu0 0.0
        %765 = vmatpush1.msra.mxu0 0.0
        %766 = vmatprep.subr.mxu0 0.0
        %767 = vmatpush1.msra.mxu0 0.0
        %768 = vmatprep.subr.mxu0 0.0
        %769 = vmatpush1.msra.mxu0 0.0
        %770 = vmatprep.subr.mxu0 0.0
        %771 = vmatpush1.msra.mxu0 0.0
        %772 = vmatprep.subr.mxu0 0.0
        %773 = vmatpush1.msra.mxu0 0.0
        %774 = vmatprep.subr.mxu0 0.0
        %775 = vmatpush1.msra.mxu0 0.0
        %776 = vmatprep.subr.mxu0 0.0
        %777 = vmatpush1.msra.mxu0 0.0
        %778 = vmatprep.subr.mxu0 0.0
        %779 = vmatpush1.msra.mxu0 0.0
        %780 = vmatprep.subr.mxu0 0.0
        %781 = vmatpush1.msra.mxu0 0.0
        %782 = vmatprep.subr.mxu0 0.0
        %783 = vmatpush1.msra.mxu0 0.0
        %784 = vmatprep.subr.mxu0 0.0
        %785 = vmatpush1.msra.mxu0 0.0
        %786 = vmatprep.subr.mxu0 0.0
        %787 = vmatpush1.msra.mxu0 0.0
        %788 = vmatprep.subr.mxu0 0.0
        %789 = vmatpush1.msra.mxu0 0.0
        %790 = vmatprep.subr.mxu0 0.0
        %791 = vmatpush1.msra.mxu0 0.0
        %792 = vmatprep.subr.mxu0 0.0
        %793 = vmatpush1.msra.mxu0 0.0
        %794 = vmatprep.subr.mxu0 0.0
        %795 = vmatpush1.msra.mxu0 0.0
        %796 = vmatprep.subr.mxu0 0.0
        %797 = vmatpush1.msra.mxu0 0.0
        %798 = vmatprep.subr.mxu0 0.0
        %799 = vmatpush1.msra.mxu0 0.0
        %800 = vmatprep.subr.mxu0 0.0
        %801 = vmatpush1.msra.mxu0 0.0
        %802 = vmatprep.subr.mxu0 0.0
        %803 = vmatpush1.msra.mxu0 0.0
        %804 = vmatprep.subr.mxu0 0.0
        %805 = vmatpush1.msra.mxu0 0.0
        %806 = vmatprep.subr.mxu0 0.0
        %807 = vmatpush1.msra.mxu0 0.0
        %808 = vmatprep.subr.mxu0 0.0
        %809 = vmatpush1.msra.mxu0 0.0
        %810 = vmatprep.subr.mxu0 0.0
        %811 = vmatpush1.msra.mxu0 0.0
        %812 = vmatprep.subr.mxu0 0.0
        %813 = vmatpush1.msra.mxu0 0.0
        %814 = vmatprep.subr.mxu0 0.0
        %815 = vmatpush1.msra.mxu0 0.0
        %816 = vmatprep.subr.mxu0 0.0
        %817 = vmatpush1.msra.mxu0 0.0
        %818 = vmatprep.subr.mxu0 0.0
        %819 = vmatpush1.msra.mxu0 0.0
        %820 = vmatprep.mubr.f32.mxu0 0.0
        %821 = vmatmul.mubr.f32.gmra.mrb[0].mxu0 %v612
        %v822 = vpop.f32.mrb[0].mxu0
        %v823 = vadd.f32 %v606, %v822
        %v824 = vpop.f32.mrb[0].mxu0
        %v825 = vadd.f32 %v608, %v824
        %826 = vdwg.mxu0
        %v827 = vld [vmem:[%s2] sm:$0xff]
        %829 = vset.pattern.permute.xlu0 0
        %830 = vperm.xlu0 %829, %v827
        %v831 = vpop.permute.xlu0 %830
        %v833 = vadd.f32 %v681, %v831
        %v834 = vadd.f32 %v683, %v831
        %v835 = vadd.f32 %v752, %v831
        %v836 = vadd.f32 %v754, %v831
        %v837 = vadd.f32 %v823, %v831
        %v838 = vadd.f32 %v825, %v831
        %v839 = vmax.f32 %v833, 0.0
        %v840 = vmax.f32 %v834, 0.0
        %v841 = vmax.f32 %v835, 0.0
        %v842 = vmax.f32 %v836, 0.0
        %v843 = vmax.f32 %v837, 0.0
        %v844 = vmax.f32 %v838, 0.0
        %845 = vst [vmem:[%s274] sm:$0xff] %v839
        %846 = vst [vmem:[%s274 + $0x8] sm:$0xff] %v840
        %847 = vst [vmem:[%s274 + $0x10] sm:$0xff] %v841
        %848 = vst [vmem:[%s274 + $0x18] sm:$0xff] %v842
        %849 = vst [vmem:[%s274 + $0x20] sm:$0xff] %v843
        %850 = vst [vmem:[%s274 + $0x28] sm:$0xff] %v844
        %s851 = sand.u32 %s145, 1
        %s852 = scalar_lea.sflag [#allocation4], %s851
        %s853 = sand.u32 %s145, 1
        %s854 = smul.addr %s853, 48
        %s855 = scalar_lea.vmem [#allocation5], %s854
        // Predicated region
        $region45: #{shallow_fcn_fwd.2} parent=39 // pred_check
          %p856 = pneg %p155
        $region46: #{shallow_fcn_fwd.2} parent=39 // pred_check_branch
          %858 = sbr.rel (%p856) target = $region48
        $region47: #{shallow_fcn_fwd.2} parent=39 // pred_region
          %s859 = smul.u32 6, %s22
          %s860 = ssub.s32 22, %s859
          %p861 = scmp.lt.s32.totalorder %s860, 6
          %s862 = scalar_select %p861, %s860, 6
          %s863 = smul.u32 128, %s862
          %s865 = ssub.s32 768, %s863
          %866 = vsyncadd %s852, %s865
          %p867 = scmp.ne.s32.totalorder 0, %s863
          %s868 = smul.addr %s859, 128
          %s869 = scalar_lea.hbm %s5, %s868
          %s870 = smul.u32 %s862, 8
          %s871 = sshll.u32 %s870, 4
          %s872 = sshll.u32 %s855, 4
          %s873 = int_to_ptr.vmem [resolvable:$true] %s872
          %875 = dma.vmem_to_hbm [thread:$0]  (%p867), %s873, %s871, %s869, %s852
        $region48: #{shallow_fcn_fwd.2} parent=39 // pred_fallthru
          _
      $region40: #{shallow_fcn_fwd.2} parent=5 // pred_fallthru
        _
      %p876 = scmp.le.s32.totalorder 2, %s17
      // Predicated region
      $region49: #{shallow_fcn_fwd.2} parent=5 // pred_check
        %p877 = pneg %p876
      $region50: #{shallow_fcn_fwd.2} parent=5 // pred_check_branch
        %879 = sbr.rel (%p877) target = $region52
      $region51: #{shallow_fcn_fwd.2} parent=5 // pred_region
        %s880 = ssub.s32 %s17, 2
        // Predicated region
        $region53: #{shallow_fcn_fwd.2} parent=51 // pred_check
          %p881 = pneg %p161
        $region54: #{shallow_fcn_fwd.2} parent=51 // pred_check_branch
          %883 = sbr.rel (%p881) target = $region56
        $region55: #{shallow_fcn_fwd.2} parent=51 // pred_region
          %s884 = sand.u32 %s146, 1
          %s885 = scalar_lea.sflag [#allocation4], %s884
          %s886 = sand.u32 %s146, 1
          %s887 = smul.addr %s886, 48
          %s888 = scalar_lea.vmem [#allocation5], %s887
          %889 = dma.done %s885, 768
        $region56: #{shallow_fcn_fwd.2} parent=51 // pred_fallthru
          _
      $region52: #{shallow_fcn_fwd.2} parent=5 // pred_fallthru
        _
    $region6: #{shallow_fcn_fwd.2} parent=1 // loop_footer
      %s21 = sadd.s32 1, %s17
    $region7: #{shallow_fcn_fwd.2} parent=1 // loop_footer_branch
      %16 = sbr.rel target = $region3
    $region8: #{shallow_fcn_fwd.2} parent=1 // loop_exit
      _
    %890 = vsyncpa [#allocation3], 1
    %s891 = scalar_lea.sflag [#allocation3], 1
    %892 = vsyncpa %s891, 1
    %893 = vsyncpa [#allocation4], 1
    %s894 = scalar_lea.sflag [#allocation4], 1
    %895 = vsyncpa %s894, 1

</llo_original>
